<compile_context>
chip_gen: v7x
topology: tpu7x:2x2x1
jax: 0.10.0
libtpu: 0.0.40
codegen_flags: <defaults>
</compile_context>

<pallas_src>
import jax
import jax.numpy as jnp
from jax import lax
from jax.experimental import pallas as pl
from jax.experimental.pallas import tpu as pltpu

EPS = 1e-5
LANE = 128


def _round_up(n, m):
    return ((n + m - 1) // m) * m


def make_actor_kernel(max_action, in_pad, hidden, out_pad):
    # Row indices inside the packed [8, vec_width] parameter slab.
    G1, G2, G3, C1, C2, C3 = 0, 1, 2, 3, 4, 5

    def actor_kernel(x_ref, w1_ref, w2_ref, w3_ref, vecs_ref, o_ref):
        def bn(x, g):
            # Training-mode BN, single pass: var = E[x^2] - E[x]^2 (biased).
            mean = jnp.mean(x, axis=0, keepdims=True)
            ex2 = jnp.mean(x * x, axis=0, keepdims=True)
            # Guard: cancellation can make var slightly negative -> NaN via
            # rsqrt; one free VPU op fixes it.
            var = jnp.maximum(ex2 - mean * mean, 0.0)
            scale = g * lax.rsqrt(var + EPS)          # gamma * inv_std
            return (x - mean) * scale                 # all f32 (v5e-safe)

        x = x_ref[...]                                # [B, in_pad] f32, dense

        # Layer 1: BN(state) -> Linear -> ReLU   (beta folded into C1)
        xn = bn(x, vecs_ref[G1:G1 + 1, :in_pad])
        h = jnp.dot(xn.astype(jnp.bfloat16), w1_ref[...],
                    preferred_element_type=jnp.float32)
        h = jnp.maximum(h + vecs_ref[C1:C1 + 1, :hidden], 0.0)

        # Layer 2: BN -> Linear -> ReLU
        hn = bn(h, vecs_ref[G2:G2 + 1, :hidden])
        h = jnp.dot(hn.astype(jnp.bfloat16), w2_ref[...],
                    preferred_element_type=jnp.float32)
        h = jnp.maximum(h + vecs_ref[C2:C2 + 1, :hidden], 0.0)

        # Layer 3: BN -> Linear -> Tanh -> * max_action (lane-dense output)
        hn = bn(h, vecs_ref[G3:G3 + 1, :hidden])
        z = jnp.dot(hn.astype(jnp.bfloat16), w3_ref[...],
                    preferred_element_type=jnp.float32)
        z = z + vecs_ref[C3:C3 + 1, :out_pad]
        o_ref[...] = (max_action * jnp.tanh(z)).astype(o_ref.dtype)

    return actor_kernel


def prepare_actor_params(params):
    """One-time (per parameter update) preparation, hoisted out of the
    per-call path: fold BN betas through the Linear layers, cast weights to
    bf16, pad to lane-dense shapes, and pack the six tiny per-layer vectors
    into a single [8, vec_width] f32 slab."""
    w1, b1 = params["w1"], params["b1"]
    w2, b2 = params["w2"], params["b2"]
    w3, b3 = params["w3"], params["b3"]

    in_dim, hidden = w1.shape
    action_dim = w3.shape[1]
    in_pad = _round_up(in_dim, LANE)
    out_pad = _round_up(action_dim, LANE)
    vec_width = _round_up(max(in_pad, hidden, out_pad), LANE)

    # Fold the BN shift through the Linear layer (f32, once):
    #   (xn + beta) @ W + b  ==  xn @ W + (beta @ W + b)
    c1 = params["be1"] @ w1 + b1
    c2 = params["be2"] @ w2 + b2
    c3 = params["be3"] @ w3 + b3

    # bf16 weights feed the MXU (f32 accumulation in-kernel). Zero-padded W1
    # rows / W3 cols keep the padded lanes exact zeros.
    w1p = jnp.pad(w1, ((0, in_pad - in_dim), (0, 0))).astype(jnp.bfloat16)
    w2p = w2.astype(jnp.bfloat16)
    w3p = jnp.pad(w3, ((0, 0), (0, out_pad - action_dim))).astype(jnp.bfloat16)

    def _row(v):
        return jnp.pad(v.astype(jnp.float32),
                       ((0, 0), (0, vec_width - v.shape[1])))

    # Packed slab rows: [g1, g2, g3, c1, c2, c3, 0, 0]. gamma1's padded lanes
    # are 0 so padded input columns normalize to exactly 0.
    vecs = jnp.concatenate(
        [_row(params["g1"]), _row(params["g2"]), _row(params["g3"]),
         _row(c1), _row(c2), _row(c3),
         jnp.zeros((2, vec_width), jnp.float32)], axis=0)     # [8, vec_width]

    return dict(w1=w1p, w2=w2p, w3=w3p, vecs=vecs,
                in_dim=in_dim, in_pad=in_pad, hidden=hidden,
                action_dim=action_dim, out_pad=out_pad)


def actor_forward(state, prep, max_action):
    """state: [B, state_dim] f32 -> action: [B, action_dim] f32."""
    B = state.shape[0]
    in_dim, in_pad = prep["in_dim"], prep["in_pad"]
    hidden, out_pad = prep["hidden"], prep["out_pad"]
    action_dim = prep["action_dim"]

    # Lane-dense padded input (zero cols beyond state_dim); padded columns get
    # gamma=0 and zero W1 rows, so they contribute exactly 0 downstream.
    xp = jnp.pad(state.astype(jnp.float32), ((0, 0), (0, in_pad - in_dim)))

    vmem = pl.BlockSpec(memory_space=pltpu.MemorySpace.VMEM)
    out = pl.pallas_call(
        make_actor_kernel(max_action, in_pad, hidden, out_pad),
        out_shape=jax.ShapeDtypeStruct((B, out_pad), jnp.float32),
        in_specs=[vmem] * 5,
        out_specs=vmem,
    )(xp, prep["w1"], prep["w2"], prep["w3"], prep["vecs"])

    return out[:, :action_dim]


def init_params(key, state_dim, hidden, action_dim):
    ks = jax.random.split(key, 6)
    scale = 0.05

    def lin(k, fan_in, fan_out):
        kw, kb = jax.random.split(k)
        w = scale * jax.random.normal(kw, (fan_in, fan_out), jnp.float32)
        b = scale * jax.random.normal(kb, (1, fan_out), jnp.float32)
        return w, b

    w1, b1 = lin(ks[0], state_dim, hidden)
    w2, b2 = lin(ks[1], hidden, hidden)
    w3, b3 = lin(ks[2], hidden, action_dim)

    def bn(k, dim):
        kg, kb = jax.random.split(k)
        g = 1.0 + 0.1 * jax.random.normal(kg, (1, dim), jnp.float32)
        be = 0.1 * jax.random.normal(kb, (1, dim), jnp.float32)
        return g, be

    g1, be1 = bn(ks[3], state_dim)
    g2, be2 = bn(ks[4], hidden)
    g3, be3 = bn(ks[5], hidden)

    return dict(w1=w1, b1=b1, w2=w2, b2=b2, w3=w3, b3=b3,
                g1=g1, be1=be1, g2=g2, be2=be2, g3=g3, be3=be3)


def _batchnorm_ref(x, gamma, beta):
    mean = jnp.mean(x, axis=0, keepdims=True)
    var = jnp.mean((x - mean) ** 2, axis=0, keepdims=True)  # biased variance
    return (x - mean) * lax.rsqrt(var + EPS) * gamma + beta


def actor_reference(state, params, max_action):
    """Pure-JAX f32 reference (original module semantics)."""
    h = _batchnorm_ref(state, params["g1"], params["be1"])
    h = jnp.maximum(h @ params["w1"] + params["b1"], 0.0)
    h = _batchnorm_ref(h, params["g2"], params["be2"])
    h = jnp.maximum(h @ params["w2"] + params["b2"], 0.0)
    h = _batchnorm_ref(h, params["g3"], params["be3"])
    return max_action * jnp.tanh(h @ params["w3"] + params["b3"])


if __name__ == "__main__":
    # Tennis (collaboration & competition) environment sizes.
    STATE_DIM = 24
    ACTION_DIM = 2
    HIDDEN = 256
    MAX_ACTION = 1.0
    BATCH = 16      # multiple of 16 rows -> full bf16 sublane packs on MXU LHS

    key = jax.random.PRNGKey(0)
    k_params, k_state = jax.random.split(key)

    params = init_params(k_params, STATE_DIM, HIDDEN, ACTION_DIM)
    state = jax.random.normal(k_state, (BATCH, STATE_DIM), jnp.float32)

    # Hoisted one-time preparation (bf16 cast, pad, BN-shift fold, slab pack).
    prep = prepare_actor_params(params)

    out = actor_forward(state, prep, MAX_ACTION)
    out = jax.block_until_ready(out)

    ref = actor_reference(state, params, MAX_ACTION)
    assert out.shape == (BATCH, ACTION_DIM)
    # bf16 weights perturb numerics slightly; outputs are tanh-bounded, so a
    # few-percent absolute tolerance is the right scale for this check.
    assert jnp.allclose(out, ref, atol=2e-2, rtol=2e-2), (
        f"max abs diff = {jnp.max(jnp.abs(out - ref))}")

    print("KERNEL_OK")
</pallas_src>

<mosaic_0001>
module attributes {stable_mosaic.version = 11 : i64} {
  func.func @actor_kernel(%arg0: memref<16x128xf32, #tpu.memory_space<vmem>>, %arg1: memref<128x256xbf16, #tpu.memory_space<vmem>>, %arg2: memref<256x256xbf16, #tpu.memory_space<vmem>>, %arg3: memref<256x128xbf16, #tpu.memory_space<vmem>>, %arg4: memref<8x256xf32, #tpu.memory_space<vmem>>, %arg5: memref<16x128xf32, #tpu.memory_space<vmem>>) attributes {dimension_semantics = [], scalar_prefetch = 0 : i64, scratch_operands = 0 : i64, tpu.core_type = #tpu.core_type<tc>} {
    %c0 = arith.constant 0 : index
    %c0_0 = arith.constant 0 : index
    %0 = vector.load %arg0[%c0, %c0_0] : memref<16x128xf32, #tpu.memory_space<vmem>>, vector<16x128xf32>
    %c0_1 = arith.constant 0 : index
    %c0_2 = arith.constant 0 : index
    %1 = vector.load %arg4[%c0_1, %c0_2] : memref<8x256xf32, #tpu.memory_space<vmem>>, vector<1x128xf32>
    %cst = arith.constant dense<0.000000e+00> : vector<128xf32>
    %2 = vector.multi_reduction <add>, %0, %cst [0] : vector<16x128xf32> to vector<128xf32>
    %3 = vector.shape_cast %2 : vector<128xf32> to vector<1x128xf32>
    %cst_3 = arith.constant 1.600000e+01 : f32
    %4 = vector.broadcast %cst_3 : f32 to vector<1x128xf32>
    %5 = arith.divf %3, %4 : vector<1x128xf32>
    %6 = arith.mulf %0, %0 : vector<16x128xf32>
    %cst_4 = arith.constant dense<0.000000e+00> : vector<128xf32>
    %7 = vector.multi_reduction <add>, %6, %cst_4 [0] : vector<16x128xf32> to vector<128xf32>
    %8 = vector.shape_cast %7 : vector<128xf32> to vector<1x128xf32>
    %cst_5 = arith.constant 1.600000e+01 : f32
    %9 = vector.broadcast %cst_5 : f32 to vector<1x128xf32>
    %10 = arith.divf %8, %9 : vector<1x128xf32>
    %11 = arith.mulf %5, %5 : vector<1x128xf32>
    %12 = arith.subf %10, %11 : vector<1x128xf32>
    %cst_6 = arith.constant 0.000000e+00 : f32
    %13 = vector.broadcast %cst_6 : f32 to vector<1x128xf32>
    %14 = arith.maximumf %12, %13 : vector<1x128xf32>
    %cst_7 = arith.constant 9.99999974E-6 : f32
    %15 = vector.broadcast %cst_7 : f32 to vector<1x128xf32>
    %16 = arith.addf %14, %15 : vector<1x128xf32>
    %17 = math.rsqrt %16 : vector<1x128xf32>
    %18 = arith.mulf %1, %17 : vector<1x128xf32>
    %19 = vector.broadcast %5 : vector<1x128xf32> to vector<16x128xf32>
    %20 = arith.subf %0, %19 : vector<16x128xf32>
    %21 = vector.broadcast %18 : vector<1x128xf32> to vector<16x128xf32>
    %22 = arith.mulf %20, %21 : vector<16x128xf32>
    %23 = arith.truncf %22 : vector<16x128xf32> to vector<16x128xbf16>
    %c0_8 = arith.constant 0 : index
    %c0_9 = arith.constant 0 : index
    %24 = vector.load %arg1[%c0_8, %c0_9] : memref<128x256xbf16, #tpu.memory_space<vmem>>, vector<128x256xbf16>
    %cst_10 = arith.constant dense<0.000000e+00> : vector<16x256xf32>
    %25 = tpu.matmul %23, %24, %cst_10 {dimension_numbers = #tpu.dot_dimension_numbers<[1], [0], [0], [1], [0, 0, 1, 1], [], []>} : vector<16x128xbf16>, vector<128x256xbf16>, vector<16x256xf32> -> vector<16x256xf32>
    %c3 = arith.constant 3 : index
    %c0_11 = arith.constant 0 : index
    %26 = vector.load %arg4[%c3, %c0_11] : memref<8x256xf32, #tpu.memory_space<vmem>>, vector<1x256xf32>
    %27 = vector.broadcast %26 : vector<1x256xf32> to vector<16x256xf32>
    %28 = arith.addf %25, %27 : vector<16x256xf32>
    %cst_12 = arith.constant 0.000000e+00 : f32
    %29 = vector.broadcast %cst_12 : f32 to vector<16x256xf32>
    %30 = arith.maximumf %28, %29 : vector<16x256xf32>
    %c1 = arith.constant 1 : index
    %c0_13 = arith.constant 0 : index
    %31 = vector.load %arg4[%c1, %c0_13] : memref<8x256xf32, #tpu.memory_space<vmem>>, vector<1x256xf32>
    %cst_14 = arith.constant dense<0.000000e+00> : vector<256xf32>
    %32 = vector.multi_reduction <add>, %30, %cst_14 [0] : vector<16x256xf32> to vector<256xf32>
    %33 = vector.shape_cast %32 : vector<256xf32> to vector<1x256xf32>
    %cst_15 = arith.constant 1.600000e+01 : f32
    %34 = vector.broadcast %cst_15 : f32 to vector<1x256xf32>
    %35 = arith.divf %33, %34 : vector<1x256xf32>
    %36 = arith.mulf %30, %30 : vector<16x256xf32>
    %cst_16 = arith.constant dense<0.000000e+00> : vector<256xf32>
    %37 = vector.multi_reduction <add>, %36, %cst_16 [0] : vector<16x256xf32> to vector<256xf32>
    %38 = vector.shape_cast %37 : vector<256xf32> to vector<1x256xf32>
    %cst_17 = arith.constant 1.600000e+01 : f32
    %39 = vector.broadcast %cst_17 : f32 to vector<1x256xf32>
    %40 = arith.divf %38, %39 : vector<1x256xf32>
    %41 = arith.mulf %35, %35 : vector<1x256xf32>
    %42 = arith.subf %40, %41 : vector<1x256xf32>
    %cst_18 = arith.constant 0.000000e+00 : f32
    %43 = vector.broadcast %cst_18 : f32 to vector<1x256xf32>
    %44 = arith.maximumf %42, %43 : vector<1x256xf32>
    %cst_19 = arith.constant 9.99999974E-6 : f32
    %45 = vector.broadcast %cst_19 : f32 to vector<1x256xf32>
    %46 = arith.addf %44, %45 : vector<1x256xf32>
    %47 = math.rsqrt %46 : vector<1x256xf32>
    %48 = arith.mulf %31, %47 : vector<1x256xf32>
    %49 = vector.broadcast %35 : vector<1x256xf32> to vector<16x256xf32>
    %50 = arith.subf %30, %49 : vector<16x256xf32>
    %51 = vector.broadcast %48 : vector<1x256xf32> to vector<16x256xf32>
    %52 = arith.mulf %50, %51 : vector<16x256xf32>
    %53 = arith.truncf %52 : vector<16x256xf32> to vector<16x256xbf16>
    %c0_20 = arith.constant 0 : index
    %c0_21 = arith.constant 0 : index
    %54 = vector.load %arg2[%c0_20, %c0_21] : memref<256x256xbf16, #tpu.memory_space<vmem>>, vector<256x256xbf16>
    %cst_22 = arith.constant dense<0.000000e+00> : vector<16x256xf32>
    %55 = tpu.matmul %53, %54, %cst_22 {dimension_numbers = #tpu.dot_dimension_numbers<[1], [0], [0], [1], [0, 0, 1, 1], [], []>} : vector<16x256xbf16>, vector<256x256xbf16>, vector<16x256xf32> -> vector<16x256xf32>
    %c4 = arith.constant 4 : index
    %c0_23 = arith.constant 0 : index
    %56 = vector.load %arg4[%c4, %c0_23] : memref<8x256xf32, #tpu.memory_space<vmem>>, vector<1x256xf32>
    %57 = vector.broadcast %56 : vector<1x256xf32> to vector<16x256xf32>
    %58 = arith.addf %55, %57 : vector<16x256xf32>
    %cst_24 = arith.constant 0.000000e+00 : f32
    %59 = vector.broadcast %cst_24 : f32 to vector<16x256xf32>
    %60 = arith.maximumf %58, %59 : vector<16x256xf32>
    %c2 = arith.constant 2 : index
    %c0_25 = arith.constant 0 : index
    %61 = vector.load %arg4[%c2, %c0_25] : memref<8x256xf32, #tpu.memory_space<vmem>>, vector<1x256xf32>
    %cst_26 = arith.constant dense<0.000000e+00> : vector<256xf32>
    %62 = vector.multi_reduction <add>, %60, %cst_26 [0] : vector<16x256xf32> to vector<256xf32>
    %63 = vector.shape_cast %62 : vector<256xf32> to vector<1x256xf32>
    %cst_27 = arith.constant 1.600000e+01 : f32
    %64 = vector.broadcast %cst_27 : f32 to vector<1x256xf32>
    %65 = arith.divf %63, %64 : vector<1x256xf32>
    %66 = arith.mulf %60, %60 : vector<16x256xf32>
    %cst_28 = arith.constant dense<0.000000e+00> : vector<256xf32>
    %67 = vector.multi_reduction <add>, %66, %cst_28 [0] : vector<16x256xf32> to vector<256xf32>
    %68 = vector.shape_cast %67 : vector<256xf32> to vector<1x256xf32>
    %cst_29 = arith.constant 1.600000e+01 : f32
    %69 = vector.broadcast %cst_29 : f32 to vector<1x256xf32>
    %70 = arith.divf %68, %69 : vector<1x256xf32>
    %71 = arith.mulf %65, %65 : vector<1x256xf32>
    %72 = arith.subf %70, %71 : vector<1x256xf32>
    %cst_30 = arith.constant 0.000000e+00 : f32
    %73 = vector.broadcast %cst_30 : f32 to vector<1x256xf32>
    %74 = arith.maximumf %72, %73 : vector<1x256xf32>
    %cst_31 = arith.constant 9.99999974E-6 : f32
    %75 = vector.broadcast %cst_31 : f32 to vector<1x256xf32>
    %76 = arith.addf %74, %75 : vector<1x256xf32>
    %77 = math.rsqrt %76 : vector<1x256xf32>
    %78 = arith.mulf %61, %77 : vector<1x256xf32>
    %79 = vector.broadcast %65 : vector<1x256xf32> to vector<16x256xf32>
    %80 = arith.subf %60, %79 : vector<16x256xf32>
    %81 = vector.broadcast %78 : vector<1x256xf32> to vector<16x256xf32>
    %82 = arith.mulf %80, %81 : vector<16x256xf32>
    %83 = arith.truncf %82 : vector<16x256xf32> to vector<16x256xbf16>
    %c0_32 = arith.constant 0 : index
    %c0_33 = arith.constant 0 : index
    %84 = vector.load %arg3[%c0_32, %c0_33] : memref<256x128xbf16, #tpu.memory_space<vmem>>, vector<256x128xbf16>
    %cst_34 = arith.constant dense<0.000000e+00> : vector<16x128xf32>
    %85 = tpu.matmul %83, %84, %cst_34 {dimension_numbers = #tpu.dot_dimension_numbers<[1], [0], [0], [1], [0, 0, 1, 1], [], []>} : vector<16x256xbf16>, vector<256x128xbf16>, vector<16x128xf32> -> vector<16x128xf32>
    %c5 = arith.constant 5 : index
    %c0_35 = arith.constant 0 : index
    %86 = vector.load %arg4[%c5, %c0_35] : memref<8x256xf32, #tpu.memory_space<vmem>>, vector<1x128xf32>
    %87 = vector.broadcast %86 : vector<1x128xf32> to vector<16x128xf32>
    %88 = arith.addf %85, %87 : vector<16x128xf32>
    %89 = math.tanh %88 : vector<16x128xf32>
    %cst_36 = arith.constant 1.000000e+00 : f32
    %90 = vector.broadcast %cst_36 : f32 to vector<16x128xf32>
    %91 = arith.mulf %90, %89 : vector<16x128xf32>
    %c0_37 = arith.constant 0 : index
    %c0_38 = arith.constant 0 : index
    %92 = vector.load %arg5[%c0_37, %c0_38] : memref<16x128xf32, #tpu.memory_space<vmem>>, vector<16x128xf32>
    tpu.vector_store %arg5[%c0_37, %c0_38], %91 {strides = array<i32>} : memref<16x128xf32, #tpu.memory_space<vmem>>, vector<16x128xf32>,
    return
  }
}

</mosaic_0001>

<llo_original>
// kernel: tpu_custom_call.1
$region0: #{tpu_custom_call.1}
  #allocation0 [shape = 'u32[]', space=smem, size = 0x4, offset = 0x4, fixed_abs, tag = 'smem constant byte address 0x4 - core index']
  #allocation1 [shape = 'u32[144,128]{1,0:T(1,128)}', space=vmem, size = 0x12000, scoped, tag = 'internal scratch']
  %s0 = inlined_call_operand.hbm [shape: f32[16,128], index: 0, kind: input, shape index: {}]
  %s1 = inlined_call_operand.hbm [shape: bf16[128,256], index: 1, kind: input, shape index: {}]
  %s2 = inlined_call_operand.hbm [shape: bf16[256,256], index: 2, kind: input, shape index: {}]
  %s3 = inlined_call_operand.hbm [shape: bf16[256,128], index: 3, kind: input, shape index: {}]
  %s4 = inlined_call_operand.hbm [shape: f32[8,256], index: 4, kind: input, shape index: {}]
  %s5 = inlined_call_operand.hbm [shape: f32[16,128], index: 5, kind: output, shape index: {}]
  %s6 = sld [smem:[#allocation0]]
  $region50: #{tpu_custom_call.1} parent=0
    _
  %s8 = ssub.s32 1, %s6
  %s9 = scalar_select 0, %s8, %s6
  $region1: #{tpu_custom_call.1} parent=0
    #allocation2 [shape = 'u8[8192]{0}', space=vmem, size = 0x2000, scoped, tag = 'input window, operand 0, single buffered']
    #allocation3 [shape = 's32[1]{0}', space=sflag, size = 0x4, scoped, tag = 'scoped memory for tpu_custom_call.1']
    #allocation4 [shape = 's32[1]{0}', space=sflag, size = 0x4, scoped, tag = 'scoped memory for tpu_custom_call.1']
    #allocation5 [shape = 'u8[65536]{0}', space=vmem, size = 0x10000, scoped, tag = 'input window, operand 1, single buffered']
    #allocation6 [shape = 's32[1]{0}', space=sflag, size = 0x4, scoped, tag = 'scoped memory for tpu_custom_call.1']
    #allocation7 [shape = 'u8[131072]{0}', space=vmem, size = 0x20000, scoped, tag = 'input window, operand 2, single buffered']
    #allocation8 [shape = 'u8[65536]{0}', space=vmem, size = 0x10000, scoped, tag = 'input window, operand 3, single buffered']
    #allocation9 [shape = 's32[1]{0}', space=sflag, size = 0x4, scoped, tag = 'scoped memory for tpu_custom_call.1']
    #allocation10 [shape = 'u8[8192]{0}', space=vmem, size = 0x2000, scoped, tag = 'input window, operand 4, single buffered']
    #allocation11 [shape = 'u8[8192]{0}', space=vmem, size = 0x2000, scoped, tag = 'output window, operand 0, single buffered']
    %10 = vsyncpa [#allocation3], 0
    %11 = vsyncpa [#allocation6], 0
    %12 = vsyncpa [#allocation9], 0
    %13 = vsyncpa [#allocation4], 0
    // Predicated region
    $region2: #{tpu_custom_call.1} parent=1 // pred_check
      _
    $region3: #{tpu_custom_call.1} parent=1 // pred_check_branch
      %15 = sbr.rel (0) target = $region5
    $region4: #{tpu_custom_call.1} parent=1 // pred_region
      %s17 = ssub.s32 256, 256
      %18 = vsyncadd [#allocation3], %s17
      %s19 = sshll.u32 [#allocation2], 4
      %s20 = int_to_ptr.vmem [resolvable:$true] %s19
      %25 = dma.hbm_to_vmem [thread:$0]  %s0, 256, %s20, [#allocation3], 128, 128, 8
    $region5: #{tpu_custom_call.1} parent=1 // pred_fallthru
      _
    // Predicated region
    $region6: #{tpu_custom_call.1} parent=1 // pred_check
      _
    $region7: #{tpu_custom_call.1} parent=1 // pred_check_branch
      %27 = sbr.rel (0) target = $region9
    $region8: #{tpu_custom_call.1} parent=1 // pred_region
      %s29 = ssub.s32 2048, 2048
      %30 = vsyncadd [#allocation6], %s29
      %s31 = sshll.u32 [#allocation5], 4
      %s32 = int_to_ptr.vmem [resolvable:$true] %s31
      %37 = dma.hbm_to_vmem [thread:$0]  %s1, 2048, %s32, [#allocation6], 128, 128, 8
    $region9: #{tpu_custom_call.1} parent=1 // pred_fallthru
      _
    // Predicated region
    $region10: #{tpu_custom_call.1} parent=1 // pred_check
      _
    $region11: #{tpu_custom_call.1} parent=1 // pred_check_branch
      %39 = sbr.rel (0) target = $region13
    $region12: #{tpu_custom_call.1} parent=1 // pred_region
      %s41 = ssub.s32 4096, 4096
      %42 = vsyncadd [#allocation6], %s41
      %s43 = sshll.u32 [#allocation7], 4
      %s44 = int_to_ptr.vmem [resolvable:$true] %s43
      %49 = dma.hbm_to_vmem [thread:$0]  %s2, 4096, %s44, [#allocation6], 128, 128, 8
    $region13: #{tpu_custom_call.1} parent=1 // pred_fallthru
      _
    // Predicated region
    $region14: #{tpu_custom_call.1} parent=1 // pred_check
      _
    $region15: #{tpu_custom_call.1} parent=1 // pred_check_branch
      %51 = sbr.rel (0) target = $region17
    $region16: #{tpu_custom_call.1} parent=1 // pred_region
      %s53 = ssub.s32 2048, 2048
      %54 = vsyncadd [#allocation9], %s53
      %s55 = sshll.u32 [#allocation8], 4
      %s56 = int_to_ptr.vmem [resolvable:$true] %s55
      %61 = dma.hbm_to_vmem [thread:$0]  %s3, 2048, %s56, [#allocation9], 64, 64, 4
    $region17: #{tpu_custom_call.1} parent=1 // pred_fallthru
      _
    // Predicated region
    $region18: #{tpu_custom_call.1} parent=1 // pred_check
      _
    $region19: #{tpu_custom_call.1} parent=1 // pred_check_branch
      %63 = sbr.rel (0) target = $region21
    $region20: #{tpu_custom_call.1} parent=1 // pred_region
      %s65 = ssub.s32 256, 256
      %66 = vsyncadd [#allocation9], %s65
      %s68 = sshll.u32 [#allocation10], 4
      %s69 = int_to_ptr.vmem [resolvable:$true] %s68
      %71 = dma.hbm_to_vmem [thread:$0]  %s4, 256, %s69, [#allocation9]
    $region21: #{tpu_custom_call.1} parent=1 // pred_fallthru
      _
    // Predicated region
    $region22: #{tpu_custom_call.1} parent=1 // pred_check
      _
    $region23: #{tpu_custom_call.1} parent=1 // pred_check_branch
      %73 = sbr.rel (0) target = $region25
    $region24: #{tpu_custom_call.1} parent=1 // pred_region
      %74 = dma.done [#allocation3], 256
    $region25: #{tpu_custom_call.1} parent=1 // pred_fallthru
      _
    // Predicated region
    $region26: #{tpu_custom_call.1} parent=1 // pred_check
      _
    $region27: #{tpu_custom_call.1} parent=1 // pred_check_branch
      %76 = sbr.rel (0) target = $region29
    $region28: #{tpu_custom_call.1} parent=1 // pred_region
      %77 = dma.done [#allocation6], 2048
    $region29: #{tpu_custom_call.1} parent=1 // pred_fallthru
      _
    // Predicated region
    $region30: #{tpu_custom_call.1} parent=1 // pred_check
      _
    $region31: #{tpu_custom_call.1} parent=1 // pred_check_branch
      %79 = sbr.rel (0) target = $region33
    $region32: #{tpu_custom_call.1} parent=1 // pred_region
      %80 = dma.done [#allocation6], 4096
    $region33: #{tpu_custom_call.1} parent=1 // pred_fallthru
      _
    // Predicated region
    $region34: #{tpu_custom_call.1} parent=1 // pred_check
      _
    $region35: #{tpu_custom_call.1} parent=1 // pred_check_branch
      %82 = sbr.rel (0) target = $region37
    $region36: #{tpu_custom_call.1} parent=1 // pred_region
      %83 = dma.done [#allocation9], 2048
    $region37: #{tpu_custom_call.1} parent=1 // pred_fallthru
      _
    // Predicated region
    $region38: #{tpu_custom_call.1} parent=1 // pred_check
      _
    $region39: #{tpu_custom_call.1} parent=1 // pred_check_branch
      %85 = sbr.rel (0) target = $region41
    $region40: #{tpu_custom_call.1} parent=1 // pred_region
      %86 = dma.done [#allocation9], 256
    $region41: #{tpu_custom_call.1} parent=1 // pred_fallthru
      _
    %v88 = vld [vmem:[#allocation2] sm:$0xff]
    %v89 = vld [vmem:[#allocation2 + $0x8] sm:$0xff]
    %v90 = vld [vmem:[#allocation10] ss:$0 sm:$0xff]
    %v91 = vadd.f32 %v88, %v89
    %v92 = vrot.slane %v91, 4
    %v93 = vadd.f32 %v91, %v92
    %v94 = vrot.slane %v93, 2
    %v95 = vadd.f32 %v93, %v94
    %v96 = vrot.slane %v95, 1
    %v97 = vadd.f32 %v95, %v96
    %v98 = vrcp.pop 16.0
    %v99 = vmul.f32 %v97, %v98
    %v100 = vmul.f32 %v88, %v88
    %v101 = vmul.f32 %v89, %v89
    %v102 = vadd.f32 %v100, %v101
    %v103 = vrot.slane %v102, 4
    %v104 = vadd.f32 %v102, %v103
    %v105 = vrot.slane %v104, 2
    %v106 = vadd.f32 %v104, %v105
    %v107 = vrot.slane %v106, 1
    %v108 = vadd.f32 %v106, %v107
    %v109 = vmul.f32 %v108, %v98
    %v110 = vmul.f32 %v99, %v99
    %v111 = vsub.f32 %v109, %v110
    %v112 = vmax.f32 %v111, 0.0
    %v113 = vadd.f32 %v112, 1e-05
    %v114 = vrsqrt.pop %v113
    %v115 = vmul.f32 %v90, %v114
    %v116 = vsub.f32 %v88, %v99
    %v117 = vsub.f32 %v89, %v99
    %v118 = vmul.f32 %v116, %v115
    %v119 = vmul.f32 %v117, %v115
    %v120 = vpack.c.bf16 %v119, %v118
    %v121 = vld [vmem:[#allocation5] sm:$0xff]
    %v122 = vld [vmem:[#allocation5 + $0x8] sm:$0xff]
    %v123 = vld [vmem:[#allocation5 + $0x10] sm:$0xff]
    %v124 = vld [vmem:[#allocation5 + $0x18] sm:$0xff]
    %v125 = vld [vmem:[#allocation5 + $0x20] sm:$0xff]
    %v126 = vld [vmem:[#allocation5 + $0x28] sm:$0xff]
    %v127 = vld [vmem:[#allocation5 + $0x30] sm:$0xff]
    %v128 = vld [vmem:[#allocation5 + $0x38] sm:$0xff]
    %v129 = vld [vmem:[#allocation5 + $0x40] sm:$0xff]
    %v130 = vld [vmem:[#allocation5 + $0x48] sm:$0xff]
    %v131 = vld [vmem:[#allocation5 + $0x50] sm:$0xff]
    %v132 = vld [vmem:[#allocation5 + $0x58] sm:$0xff]
    %v133 = vld [vmem:[#allocation5 + $0x60] sm:$0xff]
    %v134 = vld [vmem:[#allocation5 + $0x68] sm:$0xff]
    %v135 = vld [vmem:[#allocation5 + $0x70] sm:$0xff]
    %v136 = vld [vmem:[#allocation5 + $0x78] sm:$0xff]
    %s137 = scalar_lea.vmem [#allocation10], 3
    %v138 = vld [vmem:[%s137] ss:$8 sm:$0x3]
    %v140 = vlaneseq
    %v141 = vshrl.u32 %v140, 7
    %v142 = vsub.s32 0, %v141
    %v143 = vrot.slane %v138, %v142
    %v144 = vlaneseq
    %v145 = vshrl.u32 %v144, 7
    %v146 = vsub.s32 1, %v145
    %v147 = vrot.slane %v138, %v146
    %v166 = vunpack.c.l.b16 %v121
    %v167 = vunpack.c.h.b16 %v121
    %v168 = vunpack.c.l.b16 %v122
    %v169 = vunpack.c.h.b16 %v122
    %v170 = vunpack.c.l.b16 %v123
    %v171 = vunpack.c.h.b16 %v123
    %v172 = vunpack.c.l.b16 %v124
    %v173 = vunpack.c.h.b16 %v124
    %v174 = vunpack.c.l.b16 %v125
    %v175 = vunpack.c.h.b16 %v125
    %v176 = vunpack.c.l.b16 %v126
    %v177 = vunpack.c.h.b16 %v126
    %v178 = vunpack.c.l.b16 %v127
    %v179 = vunpack.c.h.b16 %v127
    %v180 = vunpack.c.l.b16 %v128
    %v181 = vunpack.c.h.b16 %v128
    %v182 = vunpack.c.l.b16 %v129
    %v183 = vunpack.c.h.b16 %v129
    %v184 = vunpack.c.l.b16 %v130
    %v185 = vunpack.c.h.b16 %v130
    %v186 = vunpack.c.l.b16 %v131
    %v187 = vunpack.c.h.b16 %v131
    %v188 = vunpack.c.l.b16 %v132
    %v189 = vunpack.c.h.b16 %v132
    %v190 = vunpack.c.l.b16 %v133
    %v191 = vunpack.c.h.b16 %v133
    %v192 = vunpack.c.l.b16 %v134
    %v193 = vunpack.c.h.b16 %v134
    %v194 = vunpack.c.l.b16 %v135
    %v195 = vunpack.c.h.b16 %v135
    %v196 = vunpack.c.l.b16 %v136
    %v197 = vunpack.c.h.b16 %v136
    %v198 = vpack.c.b16 %v168, %v166
    %v199 = vpack.c.b16 %v169, %v167
    %v200 = vpack.c.b16 %v172, %v170
    %v201 = vpack.c.b16 %v173, %v171
    %v202 = vpack.c.b16 %v176, %v174
    %v203 = vpack.c.b16 %v177, %v175
    %v204 = vpack.c.b16 %v180, %v178
    %v205 = vpack.c.b16 %v181, %v179
    %v206 = vpack.c.b16 %v184, %v182
    %v207 = vpack.c.b16 %v185, %v183
    %v208 = vpack.c.b16 %v188, %v186
    %v209 = vpack.c.b16 %v189, %v187
    %v210 = vpack.c.b16 %v192, %v190
    %v211 = vpack.c.b16 %v193, %v191
    %v212 = vpack.c.b16 %v196, %v194
    %v213 = vpack.c.b16 %v197, %v195
    %230 = vmatprep.subr.bf16.mxu0 %v199
    %231 = vmatpush1.bf16.msra.mxu0 %v198
    %232 = vmatprep.subr.bf16.mxu0 %v201
    %233 = vmatpush1.bf16.msra.mxu0 %v200
    %234 = vmatprep.subr.bf16.mxu0 %v203
    %235 = vmatpush1.bf16.msra.mxu0 %v202
    %236 = vmatprep.subr.bf16.mxu0 %v205
    %237 = vmatpush1.bf16.msra.mxu0 %v204
    %238 = vmatprep.subr.bf16.mxu0 %v207
    %239 = vmatpush1.bf16.msra.mxu0 %v206
    %240 = vmatprep.subr.bf16.mxu0 %v209
    %241 = vmatpush1.bf16.msra.mxu0 %v208
    %242 = vmatprep.subr.bf16.mxu0 %v211
    %243 = vmatpush1.bf16.msra.mxu0 %v210
    %244 = vmatprep.subr.bf16.mxu0 %v213
    %245 = vmatpush1.bf16.msra.mxu0 %v212
    %246 = vmatprep.subr.bf16.mxu0 0
    %247 = vmatpush1.bf16.msra.mxu0 0
    %248 = vmatprep.subr.bf16.mxu0 0
    %249 = vmatpush1.bf16.msra.mxu0 0
    %250 = vmatprep.subr.bf16.mxu0 0
    %251 = vmatpush1.bf16.msra.mxu0 0
    %252 = vmatprep.subr.bf16.mxu0 0
    %253 = vmatpush1.bf16.msra.mxu0 0
    %254 = vmatprep.subr.bf16.mxu0 0
    %255 = vmatpush1.bf16.msra.mxu0 0
    %256 = vmatprep.subr.bf16.mxu0 0
    %257 = vmatpush1.bf16.msra.mxu0 0
    %258 = vmatprep.subr.bf16.mxu0 0
    %259 = vmatpush1.bf16.msra.mxu0 0
    %260 = vmatprep.subr.bf16.mxu0 0
    %261 = vmatpush1.bf16.msra.mxu0 0
    %262 = vmatprep.mubr.bf16.mxu0 0
    %263 = vmatmul.mubr.bf16.gmra.mrb[0].mxu0 %v120
    %v264 = vpop.f32.mrb[0].mxu0
    %v265 = vadd.f32 %v143, %v264
    %v266 = vpop.f32.mrb[0].mxu0
    %v267 = vadd.f32 %v147, %v266
    %v268 = vpop.f32.mrb[0].mxu0
    %v269 = vadd.f32 %v143, %v268
    %v270 = vpop.f32.mrb[0].mxu0
    %v271 = vadd.f32 %v147, %v270
    %272 = vdwg.mxu0
    %v273 = vmax.f32 %v265, 0.0
    %v274 = vmax.f32 %v267, 0.0
    %v275 = vmax.f32 %v269, 0.0
    %v276 = vmax.f32 %v271, 0.0
    %s277 = scalar_lea.vmem [#allocation10], 1
    %v278 = vld [vmem:[%s277] ss:$8 sm:$0x3]
    %v279 = vadd.f32 %v273, %v275
    %v280 = vrot.slane %v279, 4
    %v281 = vadd.f32 %v279, %v280
    %v282 = vrot.slane %v281, 2
    %v283 = vadd.f32 %v281, %v282
    %v284 = vrot.slane %v283, 1
    %v285 = vadd.f32 %v283, %v284
    %v286 = vadd.f32 %v274, %v276
    %v287 = vrot.slane %v286, 4
    %v288 = vadd.f32 %v286, %v287
    %v289 = vrot.slane %v288, 2
    %v290 = vadd.f32 %v288, %v289
    %v291 = vrot.slane %v290, 1
    %v292 = vadd.f32 %v290, %v291
    %v293 = vmul.f32 %v285, %v98
    %v294 = vmul.f32 %v292, %v98
    %v295 = vmul.f32 %v273, %v273
    %v296 = vmul.f32 %v274, %v274
    %v297 = vmul.f32 %v275, %v275
    %v298 = vmul.f32 %v276, %v276
    %v299 = vadd.f32 %v295, %v297
    %v300 = vrot.slane %v299, 4
    %v301 = vadd.f32 %v299, %v300
    %v302 = vrot.slane %v301, 2
    %v303 = vadd.f32 %v301, %v302
    %v304 = vrot.slane %v303, 1
    %v305 = vadd.f32 %v303, %v304
    %v306 = vadd.f32 %v296, %v298
    %v307 = vrot.slane %v306, 4
    %v308 = vadd.f32 %v306, %v307
    %v309 = vrot.slane %v308, 2
    %v310 = vadd.f32 %v308, %v309
    %v311 = vrot.slane %v310, 1
    %v312 = vadd.f32 %v310, %v311
    %v313 = vmul.f32 %v305, %v98
    %v314 = vmul.f32 %v312, %v98
    %v315 = vmul.f32 %v293, %v293
    %v316 = vmul.f32 %v294, %v294
    %v317 = vsub.f32 %v313, %v315
    %v318 = vsub.f32 %v314, %v316
    %v319 = vmax.f32 %v317, 0.0
    %v320 = vmax.f32 %v318, 0.0
    %v321 = vadd.f32 %v319, 1e-05
    %v322 = vadd.f32 %v320, 1e-05
    %v323 = vrsqrt.pop %v321
    %v324 = vrsqrt.pop %v322
    %v327 = vcombine.low %v323, %v324
    %v329 = vunpack.c.l.s4 1966171168
    %v330 = vunpack.c.0.s8 %v329
    %v331 = vlaneseq
    %v332 = vshrl.u32 %v331, 7
    %v333 = vsub.s32 %v330, %v332
    %v334 = vrot.slane %v327, %v333
    %v336 = vunpack.c.l.s4 1966171168
    %v337 = vunpack.c.0.s8 %v336
    %v338 = vlaneseq
    %v339 = vshrl.u32 %v338, 7
    %v340 = vsub.s32 %v337, %v339
    %v341 = vrot.slane %v334, %v340
    %v343 = vmul.f32 %v278, %v341
    %v344 = vsub.f32 %v273, %v293
    %v345 = vsub.f32 %v274, %v294
    %v346 = vsub.f32 %v275, %v293
    %v347 = vsub.f32 %v276, %v294
    %v349 = vlaneseq
    %v350 = vshrl.u32 %v349, 7
    %v351 = vsub.s32 0, %v350
    %v352 = vrot.slane %v343, %v351
    %v353 = vlaneseq
    %v354 = vshrl.u32 %v353, 7
    %v355 = vsub.s32 1, %v354
    %v356 = vrot.slane %v343, %v355
    %v359 = vmul.f32 %v344, %v352
    %v360 = vmul.f32 %v345, %v356
    %v361 = vmul.f32 %v346, %v352
    %v362 = vmul.f32 %v347, %v356
    %v363 = vpack.c.bf16 %v361, %v359
    %v364 = vpack.c.bf16 %v362, %v360
    %v365 = vld [vmem:[#allocation7] sm:$0xff]
    %v366 = vld [vmem:[#allocation7 + $0x8] sm:$0xff]
    %v367 = vld [vmem:[#allocation7 + $0x10] sm:$0xff]
    %v368 = vld [vmem:[#allocation7 + $0x18] sm:$0xff]
    %v369 = vld [vmem:[#allocation7 + $0x20] sm:$0xff]
    %v370 = vld [vmem:[#allocation7 + $0x28] sm:$0xff]
    %v371 = vld [vmem:[#allocation7 + $0x30] sm:$0xff]
    %v372 = vld [vmem:[#allocation7 + $0x38] sm:$0xff]
    %v373 = vld [vmem:[#allocation7 + $0x40] sm:$0xff]
    %v374 = vld [vmem:[#allocation7 + $0x48] sm:$0xff]
    %v375 = vld [vmem:[#allocation7 + $0x50] sm:$0xff]
    %v376 = vld [vmem:[#allocation7 + $0x58] sm:$0xff]
    %v377 = vld [vmem:[#allocation7 + $0x60] sm:$0xff]
    %v378 = vld [vmem:[#allocation7 + $0x68] sm:$0xff]
    %v379 = vld [vmem:[#allocation7 + $0x70] sm:$0xff]
    %v380 = vld [vmem:[#allocation7 + $0x78] sm:$0xff]
    %v381 = vld [vmem:[#allocation7 + $0x80] sm:$0xff]
    %v382 = vld [vmem:[#allocation7 + $0x88] sm:$0xff]
    %v383 = vld [vmem:[#allocation7 + $0x90] sm:$0xff]
    %v384 = vld [vmem:[#allocation7 + $0x98] sm:$0xff]
    %v385 = vld [vmem:[#allocation7 + $0xa0] sm:$0xff]
    %v386 = vld [vmem:[#allocation7 + $0xa8] sm:$0xff]
    %v387 = vld [vmem:[#allocation7 + $0xb0] sm:$0xff]
    %v388 = vld [vmem:[#allocation7 + $0xb8] sm:$0xff]
    %v389 = vld [vmem:[#allocation7 + $0xc0] sm:$0xff]
    %v390 = vld [vmem:[#allocation7 + $0xc8] sm:$0xff]
    %v391 = vld [vmem:[#allocation7 + $0xd0] sm:$0xff]
    %v392 = vld [vmem:[#allocation7 + $0xd8] sm:$0xff]
    %v393 = vld [vmem:[#allocation7 + $0xe0] sm:$0xff]
    %v394 = vld [vmem:[#allocation7 + $0xe8] sm:$0xff]
    %v395 = vld [vmem:[#allocation7 + $0xf0] sm:$0xff]
    %v396 = vld [vmem:[#allocation7 + $0xf8] sm:$0xff]
    %s397 = scalar_lea.vmem [#allocation10], 4
    %v398 = vld [vmem:[%s397] ss:$8 sm:$0x3]
    %v400 = vlaneseq
    %v401 = vshrl.u32 %v400, 7
    %v402 = vsub.s32 0, %v401
    %v403 = vrot.slane %v398, %v402
    %v404 = vlaneseq
    %v405 = vshrl.u32 %v404, 7
    %v406 = vsub.s32 1, %v405
    %v407 = vrot.slane %v398, %v406
    %v442 = vunpack.c.l.b16 %v365
    %v443 = vunpack.c.h.b16 %v365
    %v444 = vunpack.c.l.b16 %v366
    %v445 = vunpack.c.h.b16 %v366
    %v446 = vunpack.c.l.b16 %v367
    %v447 = vunpack.c.h.b16 %v367
    %v448 = vunpack.c.l.b16 %v368
    %v449 = vunpack.c.h.b16 %v368
    %v450 = vunpack.c.l.b16 %v369
    %v451 = vunpack.c.h.b16 %v369
    %v452 = vunpack.c.l.b16 %v370
    %v453 = vunpack.c.h.b16 %v370
    %v454 = vunpack.c.l.b16 %v371
    %v455 = vunpack.c.h.b16 %v371
    %v456 = vunpack.c.l.b16 %v372
    %v457 = vunpack.c.h.b16 %v372
    %v458 = vunpack.c.l.b16 %v373
    %v459 = vunpack.c.h.b16 %v373
    %v460 = vunpack.c.l.b16 %v374
    %v461 = vunpack.c.h.b16 %v374
    %v462 = vunpack.c.l.b16 %v375
    %v463 = vunpack.c.h.b16 %v375
    %v464 = vunpack.c.l.b16 %v376
    %v465 = vunpack.c.h.b16 %v376
    %v466 = vunpack.c.l.b16 %v377
    %v467 = vunpack.c.h.b16 %v377
    %v468 = vunpack.c.l.b16 %v378
    %v469 = vunpack.c.h.b16 %v378
    %v470 = vunpack.c.l.b16 %v379
    %v471 = vunpack.c.h.b16 %v379
    %v472 = vunpack.c.l.b16 %v380
    %v473 = vunpack.c.h.b16 %v380
    %v474 = vunpack.c.l.b16 %v381
    %v475 = vunpack.c.h.b16 %v381
    %v476 = vunpack.c.l.b16 %v382
    %v477 = vunpack.c.h.b16 %v382
    %v478 = vunpack.c.l.b16 %v383
    %v479 = vunpack.c.h.b16 %v383
    %v480 = vunpack.c.l.b16 %v384
    %v481 = vunpack.c.h.b16 %v384
    %v482 = vunpack.c.l.b16 %v385
    %v483 = vunpack.c.h.b16 %v385
    %v484 = vunpack.c.l.b16 %v386
    %v485 = vunpack.c.h.b16 %v386
    %v486 = vunpack.c.l.b16 %v387
    %v487 = vunpack.c.h.b16 %v387
    %v488 = vunpack.c.l.b16 %v388
    %v489 = vunpack.c.h.b16 %v388
    %v490 = vunpack.c.l.b16 %v389
    %v491 = vunpack.c.h.b16 %v389
    %v492 = vunpack.c.l.b16 %v390
    %v493 = vunpack.c.h.b16 %v390
    %v494 = vunpack.c.l.b16 %v391
    %v495 = vunpack.c.h.b16 %v391
    %v496 = vunpack.c.l.b16 %v392
    %v497 = vunpack.c.h.b16 %v392
    %v498 = vunpack.c.l.b16 %v393
    %v499 = vunpack.c.h.b16 %v393
    %v500 = vunpack.c.l.b16 %v394
    %v501 = vunpack.c.h.b16 %v394
    %v502 = vunpack.c.l.b16 %v395
    %v503 = vunpack.c.h.b16 %v395
    %v504 = vunpack.c.l.b16 %v396
    %v505 = vunpack.c.h.b16 %v396
    %v506 = vpack.c.b16 %v444, %v442
    %v507 = vpack.c.b16 %v445, %v443
    %v508 = vpack.c.b16 %v448, %v446
    %v509 = vpack.c.b16 %v449, %v447
    %v510 = vpack.c.b16 %v452, %v450
    %v511 = vpack.c.b16 %v453, %v451
    %v512 = vpack.c.b16 %v456, %v454
    %v513 = vpack.c.b16 %v457, %v455
    %v514 = vpack.c.b16 %v460, %v458
    %v515 = vpack.c.b16 %v461, %v459
    %v516 = vpack.c.b16 %v464, %v462
    %v517 = vpack.c.b16 %v465, %v463
    %v518 = vpack.c.b16 %v468, %v466
    %v519 = vpack.c.b16 %v469, %v467
    %v520 = vpack.c.b16 %v472, %v470
    %v521 = vpack.c.b16 %v473, %v471
    %v522 = vpack.c.b16 %v476, %v474
    %v523 = vpack.c.b16 %v477, %v475
    %v524 = vpack.c.b16 %v480, %v478
    %v525 = vpack.c.b16 %v481, %v479
    %v526 = vpack.c.b16 %v484, %v482
    %v527 = vpack.c.b16 %v485, %v483
    %v528 = vpack.c.b16 %v488, %v486
    %v529 = vpack.c.b16 %v489, %v487
    %v530 = vpack.c.b16 %v492, %v490
    %v531 = vpack.c.b16 %v493, %v491
    %v532 = vpack.c.b16 %v496, %v494
    %v533 = vpack.c.b16 %v497, %v495
    %v534 = vpack.c.b16 %v500, %v498
    %v535 = vpack.c.b16 %v501, %v499
    %v536 = vpack.c.b16 %v504, %v502
    %v537 = vpack.c.b16 %v505, %v503
    %570 = vmatprep.subr.bf16.mxu0 %v507
    %571 = vmatpush1.bf16.msra.mxu0 %v506
    %572 = vmatprep.subr.bf16.mxu0 %v509
    %573 = vmatpush1.bf16.msra.mxu0 %v508
    %574 = vmatprep.subr.bf16.mxu0 %v511
    %575 = vmatpush1.bf16.msra.mxu0 %v510
    %576 = vmatprep.subr.bf16.mxu0 %v513
    %577 = vmatpush1.bf16.msra.mxu0 %v512
    %578 = vmatprep.subr.bf16.mxu0 %v515
    %579 = vmatpush1.bf16.msra.mxu0 %v514
    %580 = vmatprep.subr.bf16.mxu0 %v517
    %581 = vmatpush1.bf16.msra.mxu0 %v516
    %582 = vmatprep.subr.bf16.mxu0 %v519
    %583 = vmatpush1.bf16.msra.mxu0 %v518
    %584 = vmatprep.subr.bf16.mxu0 %v521
    %585 = vmatpush1.bf16.msra.mxu0 %v520
    %586 = vmatprep.subr.bf16.mxu0 %v523
    %587 = vmatpush1.bf16.msra.mxu0 %v522
    %588 = vmatprep.subr.bf16.mxu0 %v525
    %589 = vmatpush1.bf16.msra.mxu0 %v524
    %590 = vmatprep.subr.bf16.mxu0 %v527
    %591 = vmatpush1.bf16.msra.mxu0 %v526
    %592 = vmatprep.subr.bf16.mxu0 %v529
    %593 = vmatpush1.bf16.msra.mxu0 %v528
    %594 = vmatprep.subr.bf16.mxu0 %v531
    %595 = vmatpush1.bf16.msra.mxu0 %v530
    %596 = vmatprep.subr.bf16.mxu0 %v533
    %597 = vmatpush1.bf16.msra.mxu0 %v532
    %598 = vmatprep.subr.bf16.mxu0 %v535
    %599 = vmatpush1.bf16.msra.mxu0 %v534
    %600 = vmatprep.subr.bf16.mxu0 %v537
    %601 = vmatpush1.bf16.msra.mxu0 %v536
    %602 = vmatprep.mubr.bf16.mxu0 %v364
    %603 = vmatmul.mubr.bf16.gmra.mrb[0].mxu0 %v363
    %v604 = vpop.f32.mrb[0].mxu0
    %v605 = vadd.f32 %v403, %v604
    %v606 = vpop.f32.mrb[0].mxu0
    %v607 = vadd.f32 %v407, %v606
    %v608 = vpop.f32.mrb[0].mxu0
    %v609 = vadd.f32 %v403, %v608
    %v610 = vpop.f32.mrb[0].mxu0
    %v611 = vadd.f32 %v407, %v610
    %612 = vdwg.mxu0
    %v613 = vmax.f32 %v605, 0.0
    %v614 = vmax.f32 %v607, 0.0
    %v615 = vmax.f32 %v609, 0.0
    %v616 = vmax.f32 %v611, 0.0
    %s617 = scalar_lea.vmem [#allocation10], 2
    %v618 = vld [vmem:[%s617] ss:$8 sm:$0x3]
    %v619 = vadd.f32 %v613, %v615
    %v620 = vrot.slane %v619, 4
    %v621 = vadd.f32 %v619, %v620
    %v622 = vrot.slane %v621, 2
    %v623 = vadd.f32 %v621, %v622
    %v624 = vrot.slane %v623, 1
    %v625 = vadd.f32 %v623, %v624
    %v626 = vadd.f32 %v614, %v616
    %v627 = vrot.slane %v626, 4
    %v628 = vadd.f32 %v626, %v627
    %v629 = vrot.slane %v628, 2
    %v630 = vadd.f32 %v628, %v629
    %v631 = vrot.slane %v630, 1
    %v632 = vadd.f32 %v630, %v631
    %v633 = vmul.f32 %v625, %v98
    %v634 = vmul.f32 %v632, %v98
    %v635 = vmul.f32 %v613, %v613
    %v636 = vmul.f32 %v614, %v614
    %v637 = vmul.f32 %v615, %v615
    %v638 = vmul.f32 %v616, %v616
    %v639 = vadd.f32 %v635, %v637
    %v640 = vrot.slane %v639, 4
    %v641 = vadd.f32 %v639, %v640
    %v642 = vrot.slane %v641, 2
    %v643 = vadd.f32 %v641, %v642
    %v644 = vrot.slane %v643, 1
    %v645 = vadd.f32 %v643, %v644
    %v646 = vadd.f32 %v636, %v638
    %v647 = vrot.slane %v646, 4
    %v648 = vadd.f32 %v646, %v647
    %v649 = vrot.slane %v648, 2
    %v650 = vadd.f32 %v648, %v649
    %v651 = vrot.slane %v650, 1
    %v652 = vadd.f32 %v650, %v651
    %v653 = vmul.f32 %v645, %v98
    %v654 = vmul.f32 %v652, %v98
    %v655 = vmul.f32 %v633, %v633
    %v656 = vmul.f32 %v634, %v634
    %v657 = vsub.f32 %v653, %v655
    %v658 = vsub.f32 %v654, %v656
    %v659 = vmax.f32 %v657, 0.0
    %v660 = vmax.f32 %v658, 0.0
    %v661 = vadd.f32 %v659, 1e-05
    %v662 = vadd.f32 %v660, 1e-05
    %v663 = vrsqrt.pop %v661
    %v664 = vrsqrt.pop %v662
    %v667 = vcombine.low %v663, %v664
    %v669 = vunpack.c.l.s4 1966171168
    %v670 = vunpack.c.0.s8 %v669
    %v671 = vlaneseq
    %v672 = vshrl.u32 %v671, 7
    %v673 = vsub.s32 %v670, %v672
    %v674 = vrot.slane %v667, %v673
    %v676 = vunpack.c.l.s4 1966171168
    %v677 = vunpack.c.0.s8 %v676
    %v678 = vlaneseq
    %v679 = vshrl.u32 %v678, 7
    %v680 = vsub.s32 %v677, %v679
    %v681 = vrot.slane %v674, %v680
    %v683 = vmul.f32 %v618, %v681
    %v684 = vsub.f32 %v613, %v633
    %v685 = vsub.f32 %v614, %v634
    %v686 = vsub.f32 %v615, %v633
    %v687 = vsub.f32 %v616, %v634
    %v689 = vlaneseq
    %v690 = vshrl.u32 %v689, 7
    %v691 = vsub.s32 0, %v690
    %v692 = vrot.slane %v683, %v691
    %v693 = vlaneseq
    %v694 = vshrl.u32 %v693, 7
    %v695 = vsub.s32 1, %v694
    %v696 = vrot.slane %v683, %v695
    %v699 = vmul.f32 %v684, %v692
    %v700 = vmul.f32 %v685, %v696
    %v701 = vmul.f32 %v686, %v692
    %v702 = vmul.f32 %v687, %v696
    %v703 = vpack.c.bf16 %v701, %v699
    %v704 = vpack.c.bf16 %v702, %v700
    %v705 = vld [vmem:[#allocation8] sm:$0xf]
    %v706 = vld [vmem:[#allocation8 + $0x4] sm:$0xf]
    %v707 = vld [vmem:[#allocation8 + $0x8] sm:$0xf]
    %v708 = vld [vmem:[#allocation8 + $0xc] sm:$0xf]
    %v709 = vld [vmem:[#allocation8 + $0x10] sm:$0xf]
    %v710 = vld [vmem:[#allocation8 + $0x14] sm:$0xf]
    %v711 = vld [vmem:[#allocation8 + $0x18] sm:$0xf]
    %v712 = vld [vmem:[#allocation8 + $0x1c] sm:$0xf]
    %v713 = vld [vmem:[#allocation8 + $0x20] sm:$0xf]
    %v714 = vld [vmem:[#allocation8 + $0x24] sm:$0xf]
    %v715 = vld [vmem:[#allocation8 + $0x28] sm:$0xf]
    %v716 = vld [vmem:[#allocation8 + $0x2c] sm:$0xf]
    %v717 = vld [vmem:[#allocation8 + $0x30] sm:$0xf]
    %v718 = vld [vmem:[#allocation8 + $0x34] sm:$0xf]
    %v719 = vld [vmem:[#allocation8 + $0x38] sm:$0xf]
    %v720 = vld [vmem:[#allocation8 + $0x3c] sm:$0xf]
    %v721 = vld [vmem:[#allocation8 + $0x40] sm:$0xf]
    %v722 = vld [vmem:[#allocation8 + $0x44] sm:$0xf]
    %v723 = vld [vmem:[#allocation8 + $0x48] sm:$0xf]
    %v724 = vld [vmem:[#allocation8 + $0x4c] sm:$0xf]
    %v725 = vld [vmem:[#allocation8 + $0x50] sm:$0xf]
    %v726 = vld [vmem:[#allocation8 + $0x54] sm:$0xf]
    %v727 = vld [vmem:[#allocation8 + $0x58] sm:$0xf]
    %v728 = vld [vmem:[#allocation8 + $0x5c] sm:$0xf]
    %v729 = vld [vmem:[#allocation8 + $0x60] sm:$0xf]
    %v730 = vld [vmem:[#allocation8 + $0x64] sm:$0xf]
    %v731 = vld [vmem:[#allocation8 + $0x68] sm:$0xf]
    %v732 = vld [vmem:[#allocation8 + $0x6c] sm:$0xf]
    %v733 = vld [vmem:[#allocation8 + $0x70] sm:$0xf]
    %v734 = vld [vmem:[#allocation8 + $0x74] sm:$0xf]
    %v735 = vld [vmem:[#allocation8 + $0x78] sm:$0xf]
    %v736 = vld [vmem:[#allocation8 + $0x7c] sm:$0xf]
    %v737 = vld [vmem:[#allocation10 + $0x5] ss:$0 sm:$0xff]
    %v770 = vunpack.c.l.b16 %v705
    %v771 = vunpack.c.l.b16 %v706
    %v772 = vunpack.c.l.b16 %v707
    %v773 = vunpack.c.l.b16 %v708
    %v774 = vunpack.c.l.b16 %v709
    %v775 = vunpack.c.l.b16 %v710
    %v776 = vunpack.c.l.b16 %v711
    %v777 = vunpack.c.l.b16 %v712
    %v778 = vunpack.c.l.b16 %v713
    %v779 = vunpack.c.l.b16 %v714
    %v780 = vunpack.c.l.b16 %v715
    %v781 = vunpack.c.l.b16 %v716
    %v782 = vunpack.c.l.b16 %v717
    %v783 = vunpack.c.l.b16 %v718
    %v784 = vunpack.c.l.b16 %v719
    %v785 = vunpack.c.l.b16 %v720
    %v786 = vunpack.c.l.b16 %v721
    %v787 = vunpack.c.l.b16 %v722
    %v788 = vunpack.c.l.b16 %v723
    %v789 = vunpack.c.l.b16 %v724
    %v790 = vunpack.c.l.b16 %v725
    %v791 = vunpack.c.l.b16 %v726
    %v792 = vunpack.c.l.b16 %v727
    %v793 = vunpack.c.l.b16 %v728
    %v794 = vunpack.c.l.b16 %v729
    %v795 = vunpack.c.l.b16 %v730
    %v796 = vunpack.c.l.b16 %v731
    %v797 = vunpack.c.l.b16 %v732
    %v798 = vunpack.c.l.b16 %v733
    %v799 = vunpack.c.l.b16 %v734
    %v800 = vunpack.c.l.b16 %v735
    %v801 = vunpack.c.l.b16 %v736
    %v802 = vpack.c.b16 %v771, %v770
    %v803 = vpack.c.b16 %v773, %v772
    %v804 = vpack.c.b16 %v775, %v774
    %v805 = vpack.c.b16 %v777, %v776
    %v806 = vpack.c.b16 %v779, %v778
    %v807 = vpack.c.b16 %v781, %v780
    %v808 = vpack.c.b16 %v783, %v782
    %v809 = vpack.c.b16 %v785, %v784
    %v810 = vpack.c.b16 %v787, %v786
    %v811 = vpack.c.b16 %v789, %v788
    %v812 = vpack.c.b16 %v791, %v790
    %v813 = vpack.c.b16 %v793, %v792
    %v814 = vpack.c.b16 %v795, %v794
    %v815 = vpack.c.b16 %v797, %v796
    %v816 = vpack.c.b16 %v799, %v798
    %v817 = vpack.c.b16 %v801, %v800
    %834 = vmatprep.subr.bf16.mxu0 0
    %835 = vmatpush1.bf16.msra.mxu0 %v802
    %836 = vmatprep.subr.bf16.mxu0 0
    %837 = vmatpush1.bf16.msra.mxu0 %v803
    %838 = vmatprep.subr.bf16.mxu0 0
    %839 = vmatpush1.bf16.msra.mxu0 %v804
    %840 = vmatprep.subr.bf16.mxu0 0
    %841 = vmatpush1.bf16.msra.mxu0 %v805
    %842 = vmatprep.subr.bf16.mxu0 0
    %843 = vmatpush1.bf16.msra.mxu0 %v806
    %844 = vmatprep.subr.bf16.mxu0 0
    %845 = vmatpush1.bf16.msra.mxu0 %v807
    %846 = vmatprep.subr.bf16.mxu0 0
    %847 = vmatpush1.bf16.msra.mxu0 %v808
    %848 = vmatprep.subr.bf16.mxu0 0
    %849 = vmatpush1.bf16.msra.mxu0 %v809
    %850 = vmatprep.subr.bf16.mxu0 0
    %851 = vmatpush1.bf16.msra.mxu0 %v810
    %852 = vmatprep.subr.bf16.mxu0 0
    %853 = vmatpush1.bf16.msra.mxu0 %v811
    %854 = vmatprep.subr.bf16.mxu0 0
    %855 = vmatpush1.bf16.msra.mxu0 %v812
    %856 = vmatprep.subr.bf16.mxu0 0
    %857 = vmatpush1.bf16.msra.mxu0 %v813
    %858 = vmatprep.subr.bf16.mxu0 0
    %859 = vmatpush1.bf16.msra.mxu0 %v814
    %860 = vmatprep.subr.bf16.mxu0 0
    %861 = vmatpush1.bf16.msra.mxu0 %v815
    %862 = vmatprep.subr.bf16.mxu0 0
    %863 = vmatpush1.bf16.msra.mxu0 %v816
    %864 = vmatprep.subr.bf16.mxu0 0
    %865 = vmatpush1.bf16.msra.mxu0 %v817
    %866 = vmatprep.mubr.bf16.mxu0 %v704
    %867 = vmatmul.mubr.bf16.gmra.mrb[0].mxu0 %v703
    %v868 = vpop.f32.mrb[0].mxu0
    %v869 = vadd.f32 %v737, %v868
    %v870 = vpop.f32.mrb[0].mxu0
    %v871 = vpop.f32.mrb[0].mxu0
    %v872 = vadd.f32 %v737, %v871
    %v873 = vpop.f32.mrb[0].mxu0
    %874 = vdwg.mxu0
    %v875 = vtanh.pop %v869
    %v876 = vtanh.pop %v872
    %877 = vst [vmem:[#allocation11] sm:$0xff] %v875
    %878 = vst [vmem:[#allocation11 + $0x8] sm:$0xff] %v876
    // Predicated region
    $region42: #{tpu_custom_call.1} parent=1 // pred_check
      _
    $region43: #{tpu_custom_call.1} parent=1 // pred_check_branch
      %880 = sbr.rel (0) target = $region45
    $region44: #{tpu_custom_call.1} parent=1 // pred_region
      %s882 = ssub.s32 256, 256
      %883 = vsyncadd [#allocation4], %s882
      %s884 = sshll.u32 [#allocation11], 4
      %s885 = int_to_ptr.vmem [resolvable:$true] %s884
      %890 = dma.vmem_to_hbm [thread:$0]  %s885, 256, %s5, [#allocation4], 128, 128, 8
    $region45: #{tpu_custom_call.1} parent=1 // pred_fallthru
      _
    // Predicated region
    $region46: #{tpu_custom_call.1} parent=1 // pred_check
      _
    $region47: #{tpu_custom_call.1} parent=1 // pred_check_branch
      %892 = sbr.rel (0) target = $region49
    $region48: #{tpu_custom_call.1} parent=1 // pred_region
      %893 = dma.done [#allocation4], 256
    $region49: #{tpu_custom_call.1} parent=1 // pred_fallthru
      _
    %894 = vsyncpa [#allocation3], 1
    %895 = vsyncpa [#allocation6], 1
    %896 = vsyncpa [#allocation9], 1
    %897 = vsyncpa [#allocation4], 1

</llo_original>
